<compile_context>
chip_gen: v6e
topology: v6e:2x2x1
jax: 0.10.0
libtpu: 0.0.40
codegen_flags: <defaults>
</compile_context>

<pallas_src>
import math
import functools

import jax
import jax.numpy as jnp
from jax import lax
from jax.experimental import pallas as pl
from jax.experimental.pallas import tpu as pltpu


# ----------------------------- configuration -------------------------------
CONFIG = dict(
    hidden_size=32,
    heads=4,
    head_dim=8,
    attn_dropout=0.0,
    ex_halt=False,
    causal=True,
)
XPOS_SCALE_BASE = 512.0  # standard XPOS default

_VMEM_LIMIT = 32 * 1024 * 1024  # safe on v5e/v6e (128 MiB) and v7x (64 MiB)


def _pick_tile(dim, candidates):
    """Largest candidate tile that divides dim, else the full dim."""
    for c in candidates:
        if dim >= c and dim % c == 0:
            return c
    return dim


# --------------------------- Pallas matmul kernel ---------------------------
def _matmul_kernel(a_ref, b_ref, o_ref, acc_ref):
    @pl.when(pl.program_id(2) == 0)
    def _init():
        acc_ref[...] = jnp.zeros(acc_ref.shape, jnp.float32)

    acc_ref[...] += jnp.dot(
        a_ref[...], b_ref[...], preferred_element_type=jnp.float32
    )

    @pl.when(pl.program_id(2) == pl.num_programs(2) - 1)
    def _store():
        o_ref[...] = acc_ref[...].astype(o_ref.dtype)


def pallas_matmul(a, b, out_dtype=jnp.float32):
    """a: (M, K) @ b: (K, N) -> (M, N). bf16 inputs, fp32 accumulation.

    Tiled 3-D grid with a VMEM fp32 accumulator; M/N axes 'parallel' so the
    grid can shard across v7x's two TensorCores, K axis 'arbitrary' (reduce).
    Small shapes collapse to a single full block automatically.
    """
    M, K = a.shape
    K2, N = b.shape
    assert K == K2
    tm = _pick_tile(M, (256, 128))
    tn = _pick_tile(N, (256, 128))   # prefer 256-wide on v6e/v7x MXU
    tk = _pick_tile(K, (512, 256, 128))
    return pl.pallas_call(
        _matmul_kernel,
        out_shape=jax.ShapeDtypeStruct((M, N), out_dtype),
        grid=(M // tm, N // tn, K // tk),
        in_specs=[
            pl.BlockSpec((tm, tk), lambda i, j, k: (i, k)),
            pl.BlockSpec((tk, tn), lambda i, j, k: (k, j)),
        ],
        out_specs=pl.BlockSpec((tm, tn), lambda i, j, k: (i, j)),
        scratch_shapes=[pltpu.VMEM((tm, tn), jnp.float32)],
        compiler_params=pltpu.CompilerParams(
            dimension_semantics=("parallel", "parallel", "arbitrary"),
            vmem_limit_bytes=_VMEM_LIMIT,
        ),
    )(a, b)


# -------------- Pallas flash-attention + fused out_proj kernel --------------
def _flash_attn_proj_kernel(q_ref, k_ref, v_ref, kmask_ref, qmask_ref, w_ref,
                            o_ref, m_sc, l_sc, acc_sc,
                            *, heads, head_dim, causal):
    # q_ref: (1, tq, H*d) bf16   k_ref/v_ref: (1, tkv, H*d) bf16
    # kmask_ref: (1, 1, tkv) f32 key-padding mask (1=valid, 0=pad)
    # qmask_ref: (1, tq, 1)  f32 query-padding mask
    # w_ref:     (H*d, D)    bf16 out_proj weight (pre-transposed), constant blk
    # o_ref:     (1, tq, D)  f32 projected output
    # Scratch (persist across KV axis): m/l (H, tq, 1) f32, acc (tq, H*d) f32.
    ki = pl.program_id(2)
    tq = q_ref.shape[1]
    tkv = k_ref.shape[1]

    @pl.when(ki == 0)
    def _init():
        m_sc[...] = jnp.full(m_sc.shape, -jnp.inf, jnp.float32)
        l_sc[...] = jnp.zeros(l_sc.shape, jnp.float32)
        acc_sc[...] = jnp.zeros(acc_sc.shape, jnp.float32)

    # Build the (tq, tkv) validity mask in-kernel (no dense HBM bias).
    valid = jnp.broadcast_to(kmask_ref[0], (tq, tkv)) > 0.0
    if causal:
        rows = pl.program_id(1) * tq + lax.broadcasted_iota(jnp.int32, (tq, tkv), 0)
        cols = ki * tkv + lax.broadcasted_iota(jnp.int32, (tq, tkv), 1)
        valid = jnp.logical_and(valid, cols <= rows)
    neg = jnp.float32(-1e30)  # finite: masks applied in fp32, never cast to bf16

    # Static head loop: all H heads share the same Q/K/V/mask DMAs per program.
    for h in range(heads):
        sl = pl.ds(h * head_dim, head_dim)
        q_h = q_ref[0, :, sl]                         # (tq, d) bf16 (scale folded in)
        k_h = k_ref[0, :, sl]                         # (tkv, d) bf16
        v_h = v_ref[0, :, sl]                         # (tkv, d) bf16

        s = lax.dot_general(                          # (tq, tkv) fp32 on the MXU
            q_h, k_h, (((1,), (1,)), ((), ())),
            preferred_element_type=jnp.float32)
        s = jnp.where(valid, s, neg)

        m_prev = m_sc[h]                              # (tq, 1)
        m_new = jnp.maximum(m_prev, jnp.max(s, axis=-1, keepdims=True))
        alpha = jnp.exp(m_prev - m_new)
        p = jnp.exp(s - m_new)
        l_sc[h] = alpha * l_sc[h] + jnp.sum(p, axis=-1, keepdims=True)
        acc_sc[:, sl] = alpha * acc_sc[:, sl] + jnp.dot(
            p.astype(v_h.dtype), v_h, preferred_element_type=jnp.float32)
        m_sc[h] = m_new

    @pl.when(ki == pl.num_programs(2) - 1)
    def _finalize():
        # Per-head softmax normalization directly in the slab accumulator.
        for h in range(heads):
            sl = pl.ds(h * head_dim, head_dim)
            inv_l = pl.reciprocal(l_sc[h], approx=True)
            # Fully key-masked rows give a finite garbage average here; they are
            # exactly the padded query rows and qm zeroes them (== pad_input).
            acc_sc[:, sl] = acc_sc[:, sl] * inv_l
        # Fused output projection: (tq, H*d) @ (H*d, D) on the MXU.
        out = jnp.dot(acc_sc[...].astype(w_ref.dtype), w_ref[...],
                      preferred_element_type=jnp.float32)
        qm = qmask_ref[0]                             # (tq, 1)
        o_ref[0] = (out * qm).astype(o_ref.dtype)


def pallas_flash_attention_proj(q, k, v, key_mask, query_mask, out_w_t,
                                *, heads, head_dim, causal):
    """q: (N, S, H*d), k/v: (N, S2, H*d) bf16; masks (N,1,S2)/(N,S,1) f32;
    out_w_t: (H*d, D) bf16.  Returns (N, S, D) f32 (out_proj fused in).

    Grid (N, q_blocks, kv_blocks); the out_proj weight is a constant block so
    the attention output never touches HBM in its intermediate layout.
    """
    N, S, Hd = q.shape
    _, S2, _ = k.shape
    D = out_w_t.shape[1]
    tq = _pick_tile(S, (256, 128))
    tkv = _pick_tile(S2, (512, 256, 128))
    kernel = functools.partial(
        _flash_attn_proj_kernel, heads=heads, head_dim=head_dim, causal=causal)
    return pl.pallas_call(
        kernel,
        out_shape=jax.ShapeDtypeStruct((N, S, D), jnp.float32),
        grid=(N, S // tq, S2 // tkv),
        in_specs=[
            pl.BlockSpec((1, tq, Hd), lambda n, qi, ki: (n, qi, 0)),
            pl.BlockSpec((1, tkv, Hd), lambda n, qi, ki: (n, ki, 0)),
            pl.BlockSpec((1, tkv, Hd), lambda n, qi, ki: (n, ki, 0)),
            pl.BlockSpec((1, 1, tkv), lambda n, qi, ki: (n, 0, ki)),
            pl.BlockSpec((1, tq, 1), lambda n, qi, ki: (n, qi, 0)),
            pl.BlockSpec((Hd, D), lambda n, qi, ki: (0, 0)),
        ],
        out_specs=pl.BlockSpec((1, tq, D), lambda n, qi, ki: (n, qi, 0)),
        scratch_shapes=[
            pltpu.VMEM((heads, tq, 1), jnp.float32),   # m
            pltpu.VMEM((heads, tq, 1), jnp.float32),   # l
            pltpu.VMEM((tq, Hd), jnp.float32),         # acc (slab layout)
        ],
        compiler_params=pltpu.CompilerParams(
            dimension_semantics=("parallel", "parallel", "arbitrary"),
            vmem_limit_bytes=_VMEM_LIMIT,
        ),
    )(q, k, v, key_mask, query_mask, out_w_t)


# ------------------------------- XPOS (glue) --------------------------------
def _xpos_factors(positions, head_dim):
    """Shared rotary/decay factors: sin, cos, scale, each (N, S, 1, d)."""
    idx = jnp.arange(0, head_dim, 2, dtype=jnp.float32)            # (d/2,)
    inv_freq = 1.0 / (10000.0 ** (idx / head_dim))                 # (d/2,)
    pos = positions.astype(jnp.float32)[:, :, None, None]          # (N,S,1,1)
    ang = pos * inv_freq                                           # (N,S,1,d/2)
    zeta = (idx + 0.4 * head_dim) / (1.4 * head_dim)               # (d/2,)
    scale = zeta ** (pos / XPOS_SCALE_BASE)                        # (N,S,1,d/2)

    def dup(t):  # duplicate-interleave along last dim: [a0,a0,a1,a1,...]
        return jnp.repeat(t, 2, axis=-1)

    return dup(jnp.sin(ang)), dup(jnp.cos(ang)), dup(scale)


def xpos_apply(x, sin, cos, scale):
    """x: (N, S, H, d). Standard XPOS (rotary + exp decay), factors precomputed.
    Broadcasts across heads (no H-fold repeat of positions)."""
    x = x.astype(jnp.float32)
    x_even = x[..., 0::2]
    x_odd = x[..., 1::2]
    x_rot = jnp.stack([-x_odd, x_even], axis=-1).reshape(x.shape)  # rotate_every_two
    return (x * cos + x_rot * sin) * scale


# ------------------------------- parameters ---------------------------------
def xavier_uniform(key, shape, gain=1.0):
    fan_out, fan_in = shape  # PyTorch nn.Linear weight layout: (out, in)
    bound = gain * math.sqrt(6.0 / (fan_in + fan_out))
    return jax.random.uniform(key, shape, jnp.float32, -bound, bound)


def init_params(key, config):
    H, d, D = config["heads"], config["head_dim"], config["hidden_size"]
    kq, kk, kv, ko = jax.random.split(key, 4)
    g = 1.0 / math.sqrt(2.0)
    q_w = xavier_uniform(kq, (H * d, D), gain=g)     # PyTorch (out, in) layout
    k_w = xavier_uniform(kk, (H * d, D), gain=g)
    v_w = xavier_uniform(kv, (H * d, D), gain=g)
    out_w = xavier_uniform(ko, (D, H * d), gain=1.0)
    scaling = d ** (-0.5)
    # Pre-transposed, fused QKV weight; 1/sqrt(d) folded into the Q columns
    # (XPOS is linear in x, so the fold commutes with the rotary encoding).
    qkv_w_t = jnp.concatenate([q_w.T * scaling, k_w.T, v_w.T], axis=1)  # (D, 3*H*d)
    return {
        "qkv_w_t": qkv_w_t.astype(jnp.bfloat16),
        "out_w_t": out_w.T.astype(jnp.bfloat16),      # (H*d, D)
    }


# ------------------------------ forward pass --------------------------------
def flash_mha_forward(params, sequence, positions, input_mask, config, xpos=True):
    N, S, D = sequence.shape
    H, d = config["heads"], config["head_dim"]
    S2 = S                       # self-attention path (kv_sequence is None)
    query_input_mask = input_mask

    # Fused Q/K/V projection: one bf16 matmul, (N*S, D) @ (D, 3*H*d).
    x2d = sequence.reshape(N * S, D).astype(jnp.bfloat16)
    qkv = pallas_matmul(x2d, params["qkv_w_t"], out_dtype=jnp.bfloat16)
    qkv = qkv.reshape(N, S, 3, H, d)
    Q, K, V = qkv[:, :, 0], qkv[:, :, 1], qkv[:, :, 2]   # (N, S, H, d)

    if xpos:
        sin, cos, scale = _xpos_factors(positions, d)    # shared factors
        K = xpos_apply(K, sin, cos, 1.0 / scale)         # downscale=True
        Q = xpos_apply(Q, sin, cos, scale)               # downscale=False

    Q = Q.reshape(N, S, H * d).astype(jnp.bfloat16)
    K = K.reshape(N, S2, H * d).astype(jnp.bfloat16)
    V = V.reshape(N, S2, H * d).astype(jnp.bfloat16)

    # Thin masks only -- the (S x S2) bias is built inside the kernel.
    key_mask = input_mask.astype(jnp.float32)[:, None, :]           # (N, 1, S2)
    query_mask = query_input_mask.astype(jnp.float32)[:, :, None]   # (N, S, 1)
    causal = bool(config["causal"]) and (S == S2)

    # Flash attention with the out_proj fused into the finalize step.
    out = pallas_flash_attention_proj(
        Q, K, V, key_mask, query_mask, params["out_w_t"],
        heads=H, head_dim=d, causal=causal,
    )  # (N, S, D) fp32
    return {"attended_values": out, "halt_sequence": None}


# ----------------------------------- main ------------------------------------
if __name__ == "__main__":
    key = jax.random.PRNGKey(0)
    k_param, k_seq = jax.random.split(key)

    N, S = 2, 8
    D = CONFIG["hidden_size"]

    params = init_params(k_param, CONFIG)
    sequence = jax.random.normal(k_seq, (N, S, D), dtype=jnp.float32)
    positions = jnp.broadcast_to(jnp.arange(S, dtype=jnp.float32), (N, S))
    # prefix-style key/query padding mask (second sequence has 6 valid tokens)
    input_mask = jnp.array(
        [[1, 1, 1, 1, 1, 1, 1, 1], [1, 1, 1, 1, 1, 1, 0, 0]], dtype=jnp.float32
    )

    result = flash_mha_forward(params, sequence, positions, input_mask, CONFIG)
    out = jax.block_until_ready(result["attended_values"])
    assert out.shape == (N, S, D)
    assert bool(jnp.all(jnp.isfinite(out)))
    print("KERNEL_OK")
</pallas_src>

<mosaic_0001>
module attributes {stable_mosaic.version = 11 : i64} {
  func.func @_matmul_kernel(%arg0: i32, %arg1: i32, %arg2: i32, %arg3: memref<16x32xbf16, #tpu.memory_space<vmem>>, %arg4: memref<32x96xbf16, #tpu.memory_space<vmem>>, %arg5: memref<16x96xbf16, #tpu.memory_space<vmem>>, %arg6: memref<16x96xf32, #tpu.memory_space<vmem>>) attributes {dimension_semantics = [#tpu.dimension_semantics<parallel>, #tpu.dimension_semantics<parallel>, #tpu.dimension_semantics<arbitrary>], iteration_bounds = array<i64: 1, 1, 1>, scalar_prefetch = 0 : i64, scratch_operands = 1 : i64, tpu.core_type = #tpu.core_type<tc>, window_params = [{transform_indices = @transform_0, window_bounds = array<i64: 16, 32>}, {transform_indices = @transform_1, window_bounds = array<i64: 32, 96>}, {transform_indices = @transform_2, window_bounds = array<i64: 16, 96>}]} {
    %c0_i32 = arith.constant 0 : i32
    %0 = arith.cmpi eq, %arg2, %c0_i32 : i32
    %1 = arith.extui %0 : i1 to i32
    %c0_i32_0 = arith.constant 0 : i32
    %2 = arith.cmpi ne, %1, %c0_i32_0 : i32
    scf.if %2 {
      %cst_10 = arith.constant 0.000000e+00 : f32
      %12 = vector.broadcast %cst_10 : f32 to vector<16x96xf32>
      %c0_11 = arith.constant 0 : index
      %c0_12 = arith.constant 0 : index
      %13 = vector.load %arg6[%c0_11, %c0_12] : memref<16x96xf32, #tpu.memory_space<vmem>>, vector<16x96xf32>
      tpu.vector_store %arg6[%c0_11, %c0_12], %12 {strides = array<i32>} : memref<16x96xf32, #tpu.memory_space<vmem>>, vector<16x96xf32>,
    } else {
    }
    %c0 = arith.constant 0 : index
    %c0_1 = arith.constant 0 : index
    %3 = vector.load %arg6[%c0, %c0_1] : memref<16x96xf32, #tpu.memory_space<vmem>>, vector<16x96xf32>
    %c0_2 = arith.constant 0 : index
    %c0_3 = arith.constant 0 : index
    %4 = vector.load %arg3[%c0_2, %c0_3] : memref<16x32xbf16, #tpu.memory_space<vmem>>, vector<16x32xbf16>
    %c0_4 = arith.constant 0 : index
    %c0_5 = arith.constant 0 : index
    %5 = vector.load %arg4[%c0_4, %c0_5] : memref<32x96xbf16, #tpu.memory_space<vmem>>, vector<32x96xbf16>
    %cst = arith.constant dense<0.000000e+00> : vector<16x96xf32>
    %6 = tpu.matmul %4, %5, %cst {dimension_numbers = #tpu.dot_dimension_numbers<[1], [0], [0], [1], [0, 0, 1, 1], [], []>} : vector<16x32xbf16>, vector<32x96xbf16>, vector<16x96xf32> -> vector<16x96xf32>
    %7 = arith.addf %3, %6 : vector<16x96xf32>
    %c0_6 = arith.constant 0 : index
    %c0_7 = arith.constant 0 : index
    %8 = vector.load %arg6[%c0_6, %c0_7] : memref<16x96xf32, #tpu.memory_space<vmem>>, vector<16x96xf32>
    tpu.vector_store %arg6[%c0_6, %c0_7], %7 {strides = array<i32>} : memref<16x96xf32, #tpu.memory_space<vmem>>, vector<16x96xf32>,
    %c0_i32_8 = arith.constant 0 : i32
    %9 = arith.cmpi eq, %arg2, %c0_i32_8 : i32
    %10 = arith.extui %9 : i1 to i32
    %c0_i32_9 = arith.constant 0 : i32
    %11 = arith.cmpi ne, %10, %c0_i32_9 : i32
    scf.if %11 {
      %c0_10 = arith.constant 0 : index
      %c0_11 = arith.constant 0 : index
      %12 = vector.load %arg6[%c0_10, %c0_11] : memref<16x96xf32, #tpu.memory_space<vmem>>, vector<16x96xf32>
      %13 = arith.truncf %12 : vector<16x96xf32> to vector<16x96xbf16>
      %c0_12 = arith.constant 0 : index
      %c0_13 = arith.constant 0 : index
      %14 = vector.load %arg5[%c0_12, %c0_13] : memref<16x96xbf16, #tpu.memory_space<vmem>>, vector<16x96xbf16>
      tpu.vector_store %arg5[%c0_12, %c0_13], %13 {strides = array<i32>} : memref<16x96xbf16, #tpu.memory_space<vmem>>, vector<16x96xbf16>,
    } else {
    }
    return
  }
  func.func @transform_0(%arg0: i32, %arg1: i32, %arg2: i32) -> (i32, i32) {
    %c0_i32 = arith.constant 0 : i32
    return %arg0, %arg2 : i32, i32
  }
  func.func @transform_1(%arg0: i32, %arg1: i32, %arg2: i32) -> (i32, i32) {
    %c0_i32 = arith.constant 0 : i32
    return %arg2, %arg1 : i32, i32
  }
  func.func @transform_2(%arg0: i32, %arg1: i32, %arg2: i32) -> (i32, i32) {
    %c0_i32 = arith.constant 0 : i32
    return %arg0, %arg1 : i32, i32
  }
}

</mosaic_0001>

<llo_original>
// kernel: tpu_custom_call.1
$region0: #{tpu_custom_call.1}
  #allocation0 [shape = 'u32[]', space=smem, size = 0x4, offset = 0x4, fixed_abs, tag = 'smem constant byte address 0x4 - core index']
  #allocation1 [shape = 'u32[144,128]{1,0:T(1,128)}', space=vmem, size = 0x12000, scoped, tag = 'internal scratch']
  #allocation2 [shape = 'f32[16,96]{1,0:T(8,128)}', space=vmem, size = 0x2000, scoped, tag = 'scratch operand']
  %s0 = inlined_call_operand.hbm [shape: bf16[16,32], index: 0, kind: input, shape index: {}]
  %s1 = inlined_call_operand.hbm [shape: bf16[32,96], index: 1, kind: input, shape index: {}]
  %s2 = inlined_call_operand.hbm [shape: bf16[16,96], index: 2, kind: output, shape index: {}]
  %s3 = sld [smem:[#allocation0]]
  $region34: #{tpu_custom_call.1} parent=0
    _
  %s5 = ssub.s32 1, %s3
  %s6 = scalar_select 0, %s5, %s3
  $region1: #{tpu_custom_call.1} parent=0
    #allocation3 [shape = 'u8[4096]{0}', space=vmem, size = 0x1000, scoped, tag = 'input window, operand 0, single buffered']
    #allocation4 [shape = 's32[1]{0}', space=sflag, size = 0x4, scoped, tag = 'scoped memory for tpu_custom_call.1']
    #allocation5 [shape = 's32[1]{0}', space=sflag, size = 0x4, scoped, tag = 'scoped memory for tpu_custom_call.1']
    #allocation6 [shape = 'u8[8192]{0}', space=vmem, size = 0x2000, scoped, tag = 'input window, operand 1, single buffered']
    #allocation7 [shape = 's32[1]{0}', space=sflag, size = 0x4, scoped, tag = 'scoped memory for tpu_custom_call.1']
    #allocation8 [shape = 'u8[4096]{0}', space=vmem, size = 0x1000, scoped, tag = 'output window, operand 0, single buffered']
    %7 = vsyncpa [#allocation4], 0
    %8 = vsyncpa [#allocation7], 0
    %9 = vsyncpa [#allocation5], 0
    // Predicated region
    $region2: #{tpu_custom_call.1} parent=1 // pred_check
      _
    $region3: #{tpu_custom_call.1} parent=1 // pred_check_branch
      %11 = sbr.rel (0) target = $region5
    $region4: #{tpu_custom_call.1} parent=1 // pred_region
      %s13 = ssub.s32 128, 128
      %14 = vsyncadd [#allocation4], %s13
      %s15 = sshll.u32 [#allocation3], 4
      %s16 = int_to_ptr.vmem [resolvable:$true] %s15
      %21 = dma.hbm_to_vmem [thread:$0]  %s0, 128, %s16, [#allocation4], 64, 64, 4
    $region5: #{tpu_custom_call.1} parent=1 // pred_fallthru
      _
    // Predicated region
    $region6: #{tpu_custom_call.1} parent=1 // pred_check
      _
    $region7: #{tpu_custom_call.1} parent=1 // pred_check_branch
      %23 = sbr.rel (0) target = $region9
    $region8: #{tpu_custom_call.1} parent=1 // pred_region
      %s25 = ssub.s32 256, 256
      %26 = vsyncadd [#allocation7], %s25
      %s27 = sshll.u32 [#allocation6], 4
      %s28 = int_to_ptr.vmem [resolvable:$true] %s27
      %33 = dma.hbm_to_vmem [thread:$0]  %s1, 256, %s28, [#allocation7], 64, 64, 4
    $region9: #{tpu_custom_call.1} parent=1 // pred_fallthru
      _
    // Predicated region
    $region10: #{tpu_custom_call.1} parent=1 // pred_check
      _
    $region11: #{tpu_custom_call.1} parent=1 // pred_check_branch
      %35 = sbr.rel (0) target = $region13
    $region12: #{tpu_custom_call.1} parent=1 // pred_region
      %36 = dma.done [#allocation4], 128
    $region13: #{tpu_custom_call.1} parent=1 // pred_fallthru
      _
    // Predicated region
    $region14: #{tpu_custom_call.1} parent=1 // pred_check
      _
    $region15: #{tpu_custom_call.1} parent=1 // pred_check_branch
      %38 = sbr.rel (0) target = $region17
    $region16: #{tpu_custom_call.1} parent=1 // pred_region
      %39 = dma.done [#allocation7], 256
    $region17: #{tpu_custom_call.1} parent=1 // pred_fallthru
      _
    %p41 = scmp.eq.s32.totalorder 0, 0
    // Predicated region
    $region18: #{tpu_custom_call.1} parent=1 // pred_check
      %p42 = pneg %p41
    $region19: #{tpu_custom_call.1} parent=1 // pred_check_branch
      %44 = sbr.rel (%p42) target = $region21
    $region20: #{tpu_custom_call.1} parent=1 // pred_region
      %vm45 = vcmask 785408
      %46 = vst.msk [vmem:[#allocation2] sm:$0xff] %vm45, 0.0
      %47 = vst.msk [vmem:[#allocation2 + $0x8] sm:$0xff] %vm45, 0.0
    $region21: #{tpu_custom_call.1} parent=1 // pred_fallthru
      _
    %v48 = vld [vmem:[#allocation2] sm:$0xff]
    %v49 = vld [vmem:[#allocation2 + $0x8] sm:$0xff]
    %v50 = vld [vmem:[#allocation3] sm:$0xf]
    %v51 = vld [vmem:[#allocation3 + $0x4] sm:$0xf]
    %v52 = vld [vmem:[#allocation6] sm:$0xf]
    %v53 = vld [vmem:[#allocation6 + $0x4] sm:$0xf]
    %v54 = vld [vmem:[#allocation6 + $0x8] sm:$0xf]
    %v55 = vld [vmem:[#allocation6 + $0xc] sm:$0xf]
    %v58 = vunpack.c.l.b16 %v50
    %v59 = vunpack.c.l.b16 %v51
    %v60 = vpack.c.b16 %v59, %v58
    %v65 = vunpack.c.l.b16 %v52
    %v66 = vunpack.c.l.b16 %v53
    %v67 = vunpack.c.l.b16 %v54
    %v68 = vunpack.c.l.b16 %v55
    %v69 = vpack.c.b16 %v66, %v65
    %v70 = vpack.c.b16 %v68, %v67
    %vm73 = vcmask 261120
    %v75 = vsel %vm73, %v60, 0
    %77 = vmatprep.subr.bf16.mxu0 0
    %78 = vmatpush1.bf16.msra.mxu0 0
    %79 = vmatprep.subr.bf16.mxu0 0
    %80 = vmatpush1.bf16.msra.mxu0 0
    %81 = vmatprep.subr.bf16.mxu0 0
    %82 = vmatpush1.bf16.msra.mxu0 0
    %83 = vmatprep.subr.bf16.mxu0 0
    %84 = vmatpush1.bf16.msra.mxu0 0
    %85 = vmatprep.subr.bf16.mxu0 0
    %86 = vmatpush1.bf16.msra.mxu0 0
    %87 = vmatprep.subr.bf16.mxu0 0
    %88 = vmatpush1.bf16.msra.mxu0 0
    %89 = vmatprep.subr.bf16.mxu0 0
    %90 = vmatpush1.bf16.msra.mxu0 %v70
    %91 = vmatprep.subr.bf16.mxu0 0
    %92 = vmatpush1.bf16.msra.mxu0 %v69
    %93 = vmatprep.subr.bf16.mxu0 0
    %94 = vmatpush2.bf16.msra.mxu0 0
    %95 = vmatprep.subr.bf16.mxu0 0
    %96 = vmatpush2.bf16.msra.mxu0 0
    %97 = vmatprep.subr.bf16.mxu0 0
    %98 = vmatpush2.bf16.msra.mxu0 0
    %99 = vmatprep.subr.bf16.mxu0 0
    %100 = vmatpush2.bf16.msra.mxu0 0
    %101 = vmatprep.subr.bf16.mxu0 0
    %102 = vmatpush2.bf16.msra.mxu0 0
    %103 = vmatprep.subr.bf16.mxu0 0
    %104 = vmatpush2.bf16.msra.mxu0 0
    %105 = vmatprep.subr.bf16.mxu0 0
    %106 = vmatpush2.bf16.msra.mxu0 0
    %107 = vmatprep.subr.bf16.mxu0 0
    %108 = vmatpush2.bf16.msra.mxu0 0
    %109 = vmatprep.mubr.bf16.mxu0 0
    %110 = vmatmul.mubr.bf16.gmra.mxu0 %v75
    %v111 = vpop.f32.mrf.mxu0
    %v112 = vadd.f32 0.0, %v111
    %v113 = vpop.f32.mrf.mxu0
    %v114 = vpop.f32.mrf.mxu0
    %v115 = vadd.f32 0.0, %v114
    %v116 = vpop.f32.mrf.mxu0
    %117 = vdwg.mxu0
    %v118 = vadd.f32 %v48, %v112
    %v119 = vadd.f32 %v49, %v115
    %vm120 = vcmask 785408
    %121 = vst.msk [vmem:[#allocation2] sm:$0xff] %vm120, %v118
    %122 = vst.msk [vmem:[#allocation2 + $0x8] sm:$0xff] %vm120, %v119
    // Predicated region
    $region22: #{tpu_custom_call.1} parent=1 // pred_check
      %p123 = pneg %p41
    $region23: #{tpu_custom_call.1} parent=1 // pred_check_branch
      %125 = sbr.rel (%p123) target = $region25
    $region24: #{tpu_custom_call.1} parent=1 // pred_region
      %v126 = vld [vmem:[#allocation2] sm:$0xff]
      %v127 = vld [vmem:[#allocation2 + $0x8] sm:$0xff]
      %v128 = vpack.c.bf16 %v127, %v126
      %v130 = vunpack.c.l.b16 %v128
      %v131 = vunpack.c.h.b16 %v128
      %v132 = vpack.c.b16 %v130, %v130
      %v133 = vpack.c.b16 %v131, %v131
      %vm136 = vcmask 781312
      %137 = vst.msk [vmem:[#allocation8] sm:$0xf] %vm136, %v132
      %138 = vst.msk [vmem:[#allocation8 + $0x4] sm:$0xf] %vm136, %v133
    $region25: #{tpu_custom_call.1} parent=1 // pred_fallthru
      _
    // Predicated region
    $region26: #{tpu_custom_call.1} parent=1 // pred_check
      _
    $region27: #{tpu_custom_call.1} parent=1 // pred_check_branch
      %140 = sbr.rel (0) target = $region29
    $region28: #{tpu_custom_call.1} parent=1 // pred_region
      %s142 = ssub.s32 128, 128
      %143 = vsyncadd [#allocation5], %s142
      %s144 = sshll.u32 [#allocation8], 4
      %s145 = int_to_ptr.vmem [resolvable:$true] %s144
      %150 = dma.vmem_to_hbm [thread:$0]  %s145, 128, %s2, [#allocation5], 64, 64, 4
    $region29: #{tpu_custom_call.1} parent=1 // pred_fallthru
      _
    // Predicated region
    $region30: #{tpu_custom_call.1} parent=1 // pred_check
      _
    $region31: #{tpu_custom_call.1} parent=1 // pred_check_branch
      %152 = sbr.rel (0) target = $region33
    $region32: #{tpu_custom_call.1} parent=1 // pred_region
      %153 = dma.done [#allocation5], 128
    $region33: #{tpu_custom_call.1} parent=1 // pred_fallthru
      _
    %154 = vsyncpa [#allocation4], 1
    %155 = vsyncpa [#allocation7], 1
    %156 = vsyncpa [#allocation5], 1

</llo_original>
